<compile_context>
chip_gen: v5e
topology: v5e:2x2
jax: 0.10.0
libtpu: 0.0.40
codegen_flags: <defaults>
</compile_context>

<pallas_src>
import jax
import jax.numpy as jnp
from jax.experimental import pallas as pl
from jax.experimental.pallas import tpu as pltpu


def _round_up(x, m):
    return (x + m - 1) // m * m


def fasttext_kernel(idw_ref, idb_ref, idt_ref,
                    embw_ref, embb_ref, embt_ref,
                    w1w_ref, w1b_ref, w1t_ref, b1_ref,
                    w2_ref, b2_ref, out_ref):
    """Fused FastText forward for one batch tile.

    idw/idb/idt: (TB, L) int32 token ids (word / bigram / trigram)
    emb*:        (Vpad, E) f32 embedding tables (VMEM-resident every grid step)
    w1*:         (E, Hp) f32 fc1 slabs, pre-scaled by 1/L (mean folded in)
    b1:          (1, Hp),  w2: (Hp, Cp),  b2: (1, Cp)
    out:         (TB, Cp) f32
    """
    TB, L = idw_ref.shape

    def pooled(ids_ref, emb_ref):
        # Bag-of-words trick: sum_l emb[id_l] == (sum_l one_hot(id_l)) @ emb.
        # The 1/L of the mean is folded into the fc1 slabs by the wrapper.
        V = emb_ref.shape[0]
        ids = ids_ref[...]                                           # (TB, L) int32
        lane_idx = jax.lax.broadcasted_iota(jnp.int32, (TB, V), 1)   # vocab on lanes
        counts = jnp.zeros((TB, V), jnp.float32)
        # L is small & static -> unrolled VPU compare/adds; no cross-sublane reduce.
        for l in range(L):
            counts = counts + (lane_idx == ids[:, l:l + 1]).astype(jnp.float32)
        return jnp.dot(counts, emb_ref[...],
                       preferred_element_type=jnp.float32)           # (TB, E)

    pw = pooled(idw_ref, embw_ref)
    pb = pooled(idb_ref, embb_ref)
    pt = pooled(idt_ref, embt_ref)

    # fc1 with the concat folded away (three slabs), full-lane bias add, ReLU.
    h = (jnp.dot(pw, w1w_ref[...], preferred_element_type=jnp.float32)
         + jnp.dot(pb, w1b_ref[...], preferred_element_type=jnp.float32)
         + jnp.dot(pt, w1t_ref[...], preferred_element_type=jnp.float32)
         + b1_ref[...])
    h = jnp.maximum(h, 0.0)
    # Dropout: identity in eval mode.
    out = jnp.dot(h, w2_ref[...], preferred_element_type=jnp.float32) + b2_ref[...]
    out_ref[...] = out.astype(out_ref.dtype)


def fasttext_forward(params, x_word, x_bigram, x_trigram, *, batch_tile=256):
    B, L = x_word.shape
    E = params["emb_word"].shape[1]
    H = params["w1"].shape[1]
    C = params["w2"].shape[1]

    # ---- lane/sublane friendly padding (done once, in the wrapper) ----------
    Hp = _round_up(H, 128)     # unmasked MXU + full-lane bias add
    Cp = _round_up(C, 128)     # lane-dense output store (no vst.msk)

    def pad_table(t):
        V = t.shape[0]
        Vp = _round_up(V, 8)
        return jnp.zeros((Vp, E), jnp.float32).at[:V, :].set(t.astype(jnp.float32))

    embw = pad_table(params["emb_word"])
    embb = pad_table(params["emb_bigram"])
    embt = pad_table(params["emb_trigram"])

    # Split fc1 weight into 3 per-feature slabs; fold the 1/L mean into them.
    w1 = params["w1"].astype(jnp.float32) / float(L)

    def pad_slab(s):
        return jnp.zeros((E, Hp), jnp.float32).at[:, :H].set(s)

    w1w = pad_slab(w1[:E])
    w1b = pad_slab(w1[E:2 * E])
    w1t = pad_slab(w1[2 * E:3 * E])
    b1p = jnp.zeros((1, Hp), jnp.float32).at[0, :H].set(params["b1"].astype(jnp.float32))
    w2p = jnp.zeros((Hp, Cp), jnp.float32).at[:H, :C].set(params["w2"].astype(jnp.float32))
    b2p = jnp.zeros((1, Cp), jnp.float32).at[0, :C].set(params["b2"].astype(jnp.float32))

    # ---- batch tiling (grid over batch; weights/tables stay VMEM-resident) --
    TB = min(_round_up(batch_tile, 8), _round_up(B, 8))
    Bp = _round_up(B, TB)

    def pad_ids(ids):
        return jnp.zeros((Bp, L), jnp.int32).at[:B, :].set(ids.astype(jnp.int32))

    idw, idb, idt = pad_ids(x_word), pad_ids(x_bigram), pad_ids(x_trigram)

    ids_spec = pl.BlockSpec((TB, L), lambda i: (i, 0))

    def resident(shape):
        # Same block index every grid step -> stays in VMEM, no re-DMA.
        return pl.BlockSpec(shape, lambda i: (0, 0))

    out_padded = pl.pallas_call(
        fasttext_kernel,
        out_shape=jax.ShapeDtypeStruct((Bp, Cp), jnp.float32),
        grid_spec=pltpu.PrefetchScalarGridSpec(
            num_scalar_prefetch=0,
            grid=(Bp // TB,),
            in_specs=[
                ids_spec, ids_spec, ids_spec,
                resident(embw.shape), resident(embb.shape), resident(embt.shape),
                resident((E, Hp)), resident((E, Hp)), resident((E, Hp)),
                resident((1, Hp)),
                resident((Hp, Cp)), resident((1, Cp)),
            ],
            out_specs=pl.BlockSpec((TB, Cp), lambda i: (i, 0)),
        ),
        compiler_params=pltpu.CompilerParams(
            dimension_semantics=("parallel",)),
    )(idw, idb, idt, embw, embb, embt, w1w, w1b, w1t, b1p, w2p, b2p)

    return out_padded[:B, :C]


def init_params(key, n_vocab, n_gram_vocab, embed, hidden, num_classes):
    ks = jax.random.split(key, 7)
    emb_word = jax.random.normal(ks[0], (n_vocab, embed), jnp.float32) * 0.1
    # padding_idx = n_vocab - 1 -> zero row, matching nn.Embedding(padding_idx=...)
    emb_word = emb_word.at[n_vocab - 1].set(0.0)
    emb_bigram = jax.random.normal(ks[1], (n_gram_vocab, embed), jnp.float32) * 0.1
    emb_trigram = jax.random.normal(ks[2], (n_gram_vocab, embed), jnp.float32) * 0.1
    w1 = jax.random.normal(ks[3], (embed * 3, hidden), jnp.float32) * 0.05
    b1 = jax.random.normal(ks[4], (hidden,), jnp.float32) * 0.01
    w2 = jax.random.normal(ks[5], (hidden, num_classes), jnp.float32) * 0.05
    b2 = jax.random.normal(ks[6], (num_classes,), jnp.float32) * 0.01
    return dict(emb_word=emb_word, emb_bigram=emb_bigram, emb_trigram=emb_trigram,
                w1=w1, b1=b1, w2=w2, b2=b2)


if __name__ == "__main__":
    # Small config consistent with the module's forward.
    N_VOCAB = 50
    N_GRAM_VOCAB = 64
    EMBED = 32
    HIDDEN = 64
    NUM_CLASSES = 8
    BATCH = 4
    SEQ = 8

    key = jax.random.PRNGKey(0)
    kp, kw, kb, kt = jax.random.split(key, 4)
    params = init_params(kp, N_VOCAB, N_GRAM_VOCAB, EMBED, HIDDEN, NUM_CLASSES)

    x_word = jax.random.randint(kw, (BATCH, SEQ), 0, N_VOCAB, dtype=jnp.int32)
    x_bigram = jax.random.randint(kb, (BATCH, SEQ), 0, N_GRAM_VOCAB, dtype=jnp.int32)
    x_trigram = jax.random.randint(kt, (BATCH, SEQ), 0, N_GRAM_VOCAB, dtype=jnp.int32)

    out = fasttext_forward(params, x_word, x_bigram, x_trigram)
    out = jax.block_until_ready(out)

    # Reference check in plain JAX (eval mode, dropout = identity),
    # matching the PyTorch forward exactly: gather -> concat -> mean -> fc1 -> relu -> fc2.
    feat = jnp.concatenate([
        jnp.take(params["emb_word"], x_word, axis=0),
        jnp.take(params["emb_bigram"], x_bigram, axis=0),
        jnp.take(params["emb_trigram"], x_trigram, axis=0)], axis=-1)
    pooled = feat.mean(axis=1)
    ref = jnp.maximum(pooled @ params["w1"] + params["b1"], 0.0) @ params["w2"] + params["b2"]
    assert out.shape == (BATCH, NUM_CLASSES)
    assert jnp.allclose(out, ref, atol=1e-4, rtol=1e-4), \
        f"max abs err = {jnp.max(jnp.abs(out - ref))}"

    print("KERNEL_OK")
</pallas_src>

<mosaic_0001>
module attributes {stable_mosaic.version = 11 : i64} {
  func.func @fasttext_kernel(%arg0: i32, %arg1: memref<8x8xi32, #tpu.memory_space<vmem>>, %arg2: memref<8x8xi32, #tpu.memory_space<vmem>>, %arg3: memref<8x8xi32, #tpu.memory_space<vmem>>, %arg4: memref<56x32xf32, #tpu.memory_space<vmem>>, %arg5: memref<64x32xf32, #tpu.memory_space<vmem>>, %arg6: memref<64x32xf32, #tpu.memory_space<vmem>>, %arg7: memref<32x128xf32, #tpu.memory_space<vmem>>, %arg8: memref<32x128xf32, #tpu.memory_space<vmem>>, %arg9: memref<32x128xf32, #tpu.memory_space<vmem>>, %arg10: memref<1x128xf32, #tpu.memory_space<vmem>>, %arg11: memref<128x128xf32, #tpu.memory_space<vmem>>, %arg12: memref<1x128xf32, #tpu.memory_space<vmem>>, %arg13: memref<8x128xf32, #tpu.memory_space<vmem>>) attributes {dimension_semantics = [#tpu.dimension_semantics<parallel>], iteration_bounds = array<i64: 1>, scalar_prefetch = 0 : i64, scratch_operands = 0 : i64, tpu.core_type = #tpu.core_type<tc>, window_params = [{transform_indices = @transform_0, window_bounds = array<i64: 8, 8>}, {transform_indices = @transform_1, window_bounds = array<i64: 8, 8>}, {transform_indices = @transform_2, window_bounds = array<i64: 8, 8>}, {pipeline_mode = #tpu.pipeline_mode<synchronous>, transform_indices = @transform_3, window_bounds = array<i64: 56, 32>}, {pipeline_mode = #tpu.pipeline_mode<synchronous>, transform_indices = @transform_4, window_bounds = array<i64: 64, 32>}, {pipeline_mode = #tpu.pipeline_mode<synchronous>, transform_indices = @transform_5, window_bounds = array<i64: 64, 32>}, {pipeline_mode = #tpu.pipeline_mode<synchronous>, transform_indices = @transform_6, window_bounds = array<i64: 32, 128>}, {pipeline_mode = #tpu.pipeline_mode<synchronous>, transform_indices = @transform_7, window_bounds = array<i64: 32, 128>}, {pipeline_mode = #tpu.pipeline_mode<synchronous>, transform_indices = @transform_8, window_bounds = array<i64: 32, 128>}, {pipeline_mode = #tpu.pipeline_mode<synchronous>, transform_indices = @transform_9, window_bounds = array<i64: 1, 128>}, {pipeline_mode = #tpu.pipeline_mode<synchronous>, transform_indices = @transform_10, window_bounds = array<i64: 128, 128>}, {pipeline_mode = #tpu.pipeline_mode<synchronous>, transform_indices = @transform_11, window_bounds = array<i64: 1, 128>}, {transform_indices = @transform_12, window_bounds = array<i64: 8, 128>}]} {
    %c0 = arith.constant 0 : index
    %c0_0 = arith.constant 0 : index
    %0 = vector.load %arg1[%c0, %c0_0] : memref<8x8xi32, #tpu.memory_space<vmem>>, vector<8x8xi32>
    %1 = tpu.iota {dimensions = array<i32: 1>} : vector<8x56xi32>
    %cst = arith.constant 0.000000e+00 : f32
    %2 = vector.broadcast %cst : f32 to vector<8x56xf32>
    %3 = vector.extract_strided_slice %0 {offsets = [0, 0], sizes = [8, 1], strides = [1, 1]} : vector<8x8xi32> to vector<8x1xi32>
    %4 = vector.broadcast %3 : vector<8x1xi32> to vector<8x56xi32>
    %5 = arith.cmpi eq, %1, %4 : vector<8x56xi32>
    %6 = arith.extui %5 : vector<8x56xi1> to vector<8x56xi32>
    %7 = arith.sitofp %6 : vector<8x56xi32> to vector<8x56xf32>
    %8 = arith.addf %2, %7 : vector<8x56xf32>
    %9 = vector.extract_strided_slice %0 {offsets = [0, 1], sizes = [8, 1], strides = [1, 1]} : vector<8x8xi32> to vector<8x1xi32>
    %10 = vector.broadcast %9 : vector<8x1xi32> to vector<8x56xi32>
    %11 = arith.cmpi eq, %1, %10 : vector<8x56xi32>
    %12 = arith.extui %11 : vector<8x56xi1> to vector<8x56xi32>
    %13 = arith.sitofp %12 : vector<8x56xi32> to vector<8x56xf32>
    %14 = arith.addf %8, %13 : vector<8x56xf32>
    %15 = vector.extract_strided_slice %0 {offsets = [0, 2], sizes = [8, 1], strides = [1, 1]} : vector<8x8xi32> to vector<8x1xi32>
    %16 = vector.broadcast %15 : vector<8x1xi32> to vector<8x56xi32>
    %17 = arith.cmpi eq, %1, %16 : vector<8x56xi32>
    %18 = arith.extui %17 : vector<8x56xi1> to vector<8x56xi32>
    %19 = arith.sitofp %18 : vector<8x56xi32> to vector<8x56xf32>
    %20 = arith.addf %14, %19 : vector<8x56xf32>
    %21 = vector.extract_strided_slice %0 {offsets = [0, 3], sizes = [8, 1], strides = [1, 1]} : vector<8x8xi32> to vector<8x1xi32>
    %22 = vector.broadcast %21 : vector<8x1xi32> to vector<8x56xi32>
    %23 = arith.cmpi eq, %1, %22 : vector<8x56xi32>
    %24 = arith.extui %23 : vector<8x56xi1> to vector<8x56xi32>
    %25 = arith.sitofp %24 : vector<8x56xi32> to vector<8x56xf32>
    %26 = arith.addf %20, %25 : vector<8x56xf32>
    %27 = vector.extract_strided_slice %0 {offsets = [0, 4], sizes = [8, 1], strides = [1, 1]} : vector<8x8xi32> to vector<8x1xi32>
    %28 = vector.broadcast %27 : vector<8x1xi32> to vector<8x56xi32>
    %29 = arith.cmpi eq, %1, %28 : vector<8x56xi32>
    %30 = arith.extui %29 : vector<8x56xi1> to vector<8x56xi32>
    %31 = arith.sitofp %30 : vector<8x56xi32> to vector<8x56xf32>
    %32 = arith.addf %26, %31 : vector<8x56xf32>
    %33 = vector.extract_strided_slice %0 {offsets = [0, 5], sizes = [8, 1], strides = [1, 1]} : vector<8x8xi32> to vector<8x1xi32>
    %34 = vector.broadcast %33 : vector<8x1xi32> to vector<8x56xi32>
    %35 = arith.cmpi eq, %1, %34 : vector<8x56xi32>
    %36 = arith.extui %35 : vector<8x56xi1> to vector<8x56xi32>
    %37 = arith.sitofp %36 : vector<8x56xi32> to vector<8x56xf32>
    %38 = arith.addf %32, %37 : vector<8x56xf32>
    %39 = vector.extract_strided_slice %0 {offsets = [0, 6], sizes = [8, 1], strides = [1, 1]} : vector<8x8xi32> to vector<8x1xi32>
    %40 = vector.broadcast %39 : vector<8x1xi32> to vector<8x56xi32>
    %41 = arith.cmpi eq, %1, %40 : vector<8x56xi32>
    %42 = arith.extui %41 : vector<8x56xi1> to vector<8x56xi32>
    %43 = arith.sitofp %42 : vector<8x56xi32> to vector<8x56xf32>
    %44 = arith.addf %38, %43 : vector<8x56xf32>
    %45 = vector.extract_strided_slice %0 {offsets = [0, 7], sizes = [8, 1], strides = [1, 1]} : vector<8x8xi32> to vector<8x1xi32>
    %46 = vector.broadcast %45 : vector<8x1xi32> to vector<8x56xi32>
    %47 = arith.cmpi eq, %1, %46 : vector<8x56xi32>
    %48 = arith.extui %47 : vector<8x56xi1> to vector<8x56xi32>
    %49 = arith.sitofp %48 : vector<8x56xi32> to vector<8x56xf32>
    %50 = arith.addf %44, %49 : vector<8x56xf32>
    %c0_1 = arith.constant 0 : index
    %c0_2 = arith.constant 0 : index
    %51 = vector.load %arg4[%c0_1, %c0_2] : memref<56x32xf32, #tpu.memory_space<vmem>>, vector<56x32xf32>
    %cst_3 = arith.constant dense<0.000000e+00> : vector<8x32xf32>
    %52 = tpu.matmul %50, %51, %cst_3 {dimension_numbers = #tpu.dot_dimension_numbers<[1], [0], [0], [1], [0, 0, 1, 1], [], []>} : vector<8x56xf32>, vector<56x32xf32>, vector<8x32xf32> -> vector<8x32xf32>
    %c0_4 = arith.constant 0 : index
    %c0_5 = arith.constant 0 : index
    %53 = vector.load %arg2[%c0_4, %c0_5] : memref<8x8xi32, #tpu.memory_space<vmem>>, vector<8x8xi32>
    %54 = tpu.iota {dimensions = array<i32: 1>} : vector<8x64xi32>
    %cst_6 = arith.constant 0.000000e+00 : f32
    %55 = vector.broadcast %cst_6 : f32 to vector<8x64xf32>
    %56 = vector.extract_strided_slice %53 {offsets = [0, 0], sizes = [8, 1], strides = [1, 1]} : vector<8x8xi32> to vector<8x1xi32>
    %57 = vector.broadcast %56 : vector<8x1xi32> to vector<8x64xi32>
    %58 = arith.cmpi eq, %54, %57 : vector<8x64xi32>
    %59 = arith.extui %58 : vector<8x64xi1> to vector<8x64xi32>
    %60 = arith.sitofp %59 : vector<8x64xi32> to vector<8x64xf32>
    %61 = arith.addf %55, %60 : vector<8x64xf32>
    %62 = vector.extract_strided_slice %53 {offsets = [0, 1], sizes = [8, 1], strides = [1, 1]} : vector<8x8xi32> to vector<8x1xi32>
    %63 = vector.broadcast %62 : vector<8x1xi32> to vector<8x64xi32>
    %64 = arith.cmpi eq, %54, %63 : vector<8x64xi32>
    %65 = arith.extui %64 : vector<8x64xi1> to vector<8x64xi32>
    %66 = arith.sitofp %65 : vector<8x64xi32> to vector<8x64xf32>
    %67 = arith.addf %61, %66 : vector<8x64xf32>
    %68 = vector.extract_strided_slice %53 {offsets = [0, 2], sizes = [8, 1], strides = [1, 1]} : vector<8x8xi32> to vector<8x1xi32>
    %69 = vector.broadcast %68 : vector<8x1xi32> to vector<8x64xi32>
    %70 = arith.cmpi eq, %54, %69 : vector<8x64xi32>
    %71 = arith.extui %70 : vector<8x64xi1> to vector<8x64xi32>
    %72 = arith.sitofp %71 : vector<8x64xi32> to vector<8x64xf32>
    %73 = arith.addf %67, %72 : vector<8x64xf32>
    %74 = vector.extract_strided_slice %53 {offsets = [0, 3], sizes = [8, 1], strides = [1, 1]} : vector<8x8xi32> to vector<8x1xi32>
    %75 = vector.broadcast %74 : vector<8x1xi32> to vector<8x64xi32>
    %76 = arith.cmpi eq, %54, %75 : vector<8x64xi32>
    %77 = arith.extui %76 : vector<8x64xi1> to vector<8x64xi32>
    %78 = arith.sitofp %77 : vector<8x64xi32> to vector<8x64xf32>
    %79 = arith.addf %73, %78 : vector<8x64xf32>
    %80 = vector.extract_strided_slice %53 {offsets = [0, 4], sizes = [8, 1], strides = [1, 1]} : vector<8x8xi32> to vector<8x1xi32>
    %81 = vector.broadcast %80 : vector<8x1xi32> to vector<8x64xi32>
    %82 = arith.cmpi eq, %54, %81 : vector<8x64xi32>
    %83 = arith.extui %82 : vector<8x64xi1> to vector<8x64xi32>
    %84 = arith.sitofp %83 : vector<8x64xi32> to vector<8x64xf32>
    %85 = arith.addf %79, %84 : vector<8x64xf32>
    %86 = vector.extract_strided_slice %53 {offsets = [0, 5], sizes = [8, 1], strides = [1, 1]} : vector<8x8xi32> to vector<8x1xi32>
    %87 = vector.broadcast %86 : vector<8x1xi32> to vector<8x64xi32>
    %88 = arith.cmpi eq, %54, %87 : vector<8x64xi32>
    %89 = arith.extui %88 : vector<8x64xi1> to vector<8x64xi32>
    %90 = arith.sitofp %89 : vector<8x64xi32> to vector<8x64xf32>
    %91 = arith.addf %85, %90 : vector<8x64xf32>
    %92 = vector.extract_strided_slice %53 {offsets = [0, 6], sizes = [8, 1], strides = [1, 1]} : vector<8x8xi32> to vector<8x1xi32>
    %93 = vector.broadcast %92 : vector<8x1xi32> to vector<8x64xi32>
    %94 = arith.cmpi eq, %54, %93 : vector<8x64xi32>
    %95 = arith.extui %94 : vector<8x64xi1> to vector<8x64xi32>
    %96 = arith.sitofp %95 : vector<8x64xi32> to vector<8x64xf32>
    %97 = arith.addf %91, %96 : vector<8x64xf32>
    %98 = vector.extract_strided_slice %53 {offsets = [0, 7], sizes = [8, 1], strides = [1, 1]} : vector<8x8xi32> to vector<8x1xi32>
    %99 = vector.broadcast %98 : vector<8x1xi32> to vector<8x64xi32>
    %100 = arith.cmpi eq, %54, %99 : vector<8x64xi32>
    %101 = arith.extui %100 : vector<8x64xi1> to vector<8x64xi32>
    %102 = arith.sitofp %101 : vector<8x64xi32> to vector<8x64xf32>
    %103 = arith.addf %97, %102 : vector<8x64xf32>
    %c0_7 = arith.constant 0 : index
    %c0_8 = arith.constant 0 : index
    %104 = vector.load %arg5[%c0_7, %c0_8] : memref<64x32xf32, #tpu.memory_space<vmem>>, vector<64x32xf32>
    %cst_9 = arith.constant dense<0.000000e+00> : vector<8x32xf32>
    %105 = tpu.matmul %103, %104, %cst_9 {dimension_numbers = #tpu.dot_dimension_numbers<[1], [0], [0], [1], [0, 0, 1, 1], [], []>} : vector<8x64xf32>, vector<64x32xf32>, vector<8x32xf32> -> vector<8x32xf32>
    %c0_10 = arith.constant 0 : index
    %c0_11 = arith.constant 0 : index
    %106 = vector.load %arg3[%c0_10, %c0_11] : memref<8x8xi32, #tpu.memory_space<vmem>>, vector<8x8xi32>
    %107 = tpu.iota {dimensions = array<i32: 1>} : vector<8x64xi32>
    %cst_12 = arith.constant 0.000000e+00 : f32
    %108 = vector.broadcast %cst_12 : f32 to vector<8x64xf32>
    %109 = vector.extract_strided_slice %106 {offsets = [0, 0], sizes = [8, 1], strides = [1, 1]} : vector<8x8xi32> to vector<8x1xi32>
    %110 = vector.broadcast %109 : vector<8x1xi32> to vector<8x64xi32>
    %111 = arith.cmpi eq, %107, %110 : vector<8x64xi32>
    %112 = arith.extui %111 : vector<8x64xi1> to vector<8x64xi32>
    %113 = arith.sitofp %112 : vector<8x64xi32> to vector<8x64xf32>
    %114 = arith.addf %108, %113 : vector<8x64xf32>
    %115 = vector.extract_strided_slice %106 {offsets = [0, 1], sizes = [8, 1], strides = [1, 1]} : vector<8x8xi32> to vector<8x1xi32>
    %116 = vector.broadcast %115 : vector<8x1xi32> to vector<8x64xi32>
    %117 = arith.cmpi eq, %107, %116 : vector<8x64xi32>
    %118 = arith.extui %117 : vector<8x64xi1> to vector<8x64xi32>
    %119 = arith.sitofp %118 : vector<8x64xi32> to vector<8x64xf32>
    %120 = arith.addf %114, %119 : vector<8x64xf32>
    %121 = vector.extract_strided_slice %106 {offsets = [0, 2], sizes = [8, 1], strides = [1, 1]} : vector<8x8xi32> to vector<8x1xi32>
    %122 = vector.broadcast %121 : vector<8x1xi32> to vector<8x64xi32>
    %123 = arith.cmpi eq, %107, %122 : vector<8x64xi32>
    %124 = arith.extui %123 : vector<8x64xi1> to vector<8x64xi32>
    %125 = arith.sitofp %124 : vector<8x64xi32> to vector<8x64xf32>
    %126 = arith.addf %120, %125 : vector<8x64xf32>
    %127 = vector.extract_strided_slice %106 {offsets = [0, 3], sizes = [8, 1], strides = [1, 1]} : vector<8x8xi32> to vector<8x1xi32>
    %128 = vector.broadcast %127 : vector<8x1xi32> to vector<8x64xi32>
    %129 = arith.cmpi eq, %107, %128 : vector<8x64xi32>
    %130 = arith.extui %129 : vector<8x64xi1> to vector<8x64xi32>
    %131 = arith.sitofp %130 : vector<8x64xi32> to vector<8x64xf32>
    %132 = arith.addf %126, %131 : vector<8x64xf32>
    %133 = vector.extract_strided_slice %106 {offsets = [0, 4], sizes = [8, 1], strides = [1, 1]} : vector<8x8xi32> to vector<8x1xi32>
    %134 = vector.broadcast %133 : vector<8x1xi32> to vector<8x64xi32>
    %135 = arith.cmpi eq, %107, %134 : vector<8x64xi32>
    %136 = arith.extui %135 : vector<8x64xi1> to vector<8x64xi32>
    %137 = arith.sitofp %136 : vector<8x64xi32> to vector<8x64xf32>
    %138 = arith.addf %132, %137 : vector<8x64xf32>
    %139 = vector.extract_strided_slice %106 {offsets = [0, 5], sizes = [8, 1], strides = [1, 1]} : vector<8x8xi32> to vector<8x1xi32>
    %140 = vector.broadcast %139 : vector<8x1xi32> to vector<8x64xi32>
    %141 = arith.cmpi eq, %107, %140 : vector<8x64xi32>
    %142 = arith.extui %141 : vector<8x64xi1> to vector<8x64xi32>
    %143 = arith.sitofp %142 : vector<8x64xi32> to vector<8x64xf32>
    %144 = arith.addf %138, %143 : vector<8x64xf32>
    %145 = vector.extract_strided_slice %106 {offsets = [0, 6], sizes = [8, 1], strides = [1, 1]} : vector<8x8xi32> to vector<8x1xi32>
    %146 = vector.broadcast %145 : vector<8x1xi32> to vector<8x64xi32>
    %147 = arith.cmpi eq, %107, %146 : vector<8x64xi32>
    %148 = arith.extui %147 : vector<8x64xi1> to vector<8x64xi32>
    %149 = arith.sitofp %148 : vector<8x64xi32> to vector<8x64xf32>
    %150 = arith.addf %144, %149 : vector<8x64xf32>
    %151 = vector.extract_strided_slice %106 {offsets = [0, 7], sizes = [8, 1], strides = [1, 1]} : vector<8x8xi32> to vector<8x1xi32>
    %152 = vector.broadcast %151 : vector<8x1xi32> to vector<8x64xi32>
    %153 = arith.cmpi eq, %107, %152 : vector<8x64xi32>
    %154 = arith.extui %153 : vector<8x64xi1> to vector<8x64xi32>
    %155 = arith.sitofp %154 : vector<8x64xi32> to vector<8x64xf32>
    %156 = arith.addf %150, %155 : vector<8x64xf32>
    %c0_13 = arith.constant 0 : index
    %c0_14 = arith.constant 0 : index
    %157 = vector.load %arg6[%c0_13, %c0_14] : memref<64x32xf32, #tpu.memory_space<vmem>>, vector<64x32xf32>
    %cst_15 = arith.constant dense<0.000000e+00> : vector<8x32xf32>
    %158 = tpu.matmul %156, %157, %cst_15 {dimension_numbers = #tpu.dot_dimension_numbers<[1], [0], [0], [1], [0, 0, 1, 1], [], []>} : vector<8x64xf32>, vector<64x32xf32>, vector<8x32xf32> -> vector<8x32xf32>
    %c0_16 = arith.constant 0 : index
    %c0_17 = arith.constant 0 : index
    %159 = vector.load %arg7[%c0_16, %c0_17] : memref<32x128xf32, #tpu.memory_space<vmem>>, vector<32x128xf32>
    %cst_18 = arith.constant dense<0.000000e+00> : vector<8x128xf32>
    %160 = tpu.matmul %52, %159, %cst_18 {dimension_numbers = #tpu.dot_dimension_numbers<[1], [0], [0], [1], [0, 0, 1, 1], [], []>} : vector<8x32xf32>, vector<32x128xf32>, vector<8x128xf32> -> vector<8x128xf32>
    %c0_19 = arith.constant 0 : index
    %c0_20 = arith.constant 0 : index
    %161 = vector.load %arg8[%c0_19, %c0_20] : memref<32x128xf32, #tpu.memory_space<vmem>>, vector<32x128xf32>
    %cst_21 = arith.constant dense<0.000000e+00> : vector<8x128xf32>
    %162 = tpu.matmul %105, %161, %cst_21 {dimension_numbers = #tpu.dot_dimension_numbers<[1], [0], [0], [1], [0, 0, 1, 1], [], []>} : vector<8x32xf32>, vector<32x128xf32>, vector<8x128xf32> -> vector<8x128xf32>
    %163 = arith.addf %160, %162 : vector<8x128xf32>
    %c0_22 = arith.constant 0 : index
    %c0_23 = arith.constant 0 : index
    %164 = vector.load %arg9[%c0_22, %c0_23] : memref<32x128xf32, #tpu.memory_space<vmem>>, vector<32x128xf32>
    %cst_24 = arith.constant dense<0.000000e+00> : vector<8x128xf32>
    %165 = tpu.matmul %158, %164, %cst_24 {dimension_numbers = #tpu.dot_dimension_numbers<[1], [0], [0], [1], [0, 0, 1, 1], [], []>} : vector<8x32xf32>, vector<32x128xf32>, vector<8x128xf32> -> vector<8x128xf32>
    %166 = arith.addf %163, %165 : vector<8x128xf32>
    %c0_25 = arith.constant 0 : index
    %c0_26 = arith.constant 0 : index
    %167 = vector.load %arg10[%c0_25, %c0_26] : memref<1x128xf32, #tpu.memory_space<vmem>>, vector<1x128xf32>
    %168 = vector.broadcast %167 : vector<1x128xf32> to vector<8x128xf32>
    %169 = arith.addf %166, %168 : vector<8x128xf32>
    %cst_27 = arith.constant 0.000000e+00 : f32
    %170 = vector.broadcast %cst_27 : f32 to vector<8x128xf32>
    %171 = arith.maximumf %169, %170 : vector<8x128xf32>
    %c0_28 = arith.constant 0 : index
    %c0_29 = arith.constant 0 : index
    %172 = vector.load %arg11[%c0_28, %c0_29] : memref<128x128xf32, #tpu.memory_space<vmem>>, vector<128x128xf32>
    %cst_30 = arith.constant dense<0.000000e+00> : vector<8x128xf32>
    %173 = tpu.matmul %171, %172, %cst_30 {dimension_numbers = #tpu.dot_dimension_numbers<[1], [0], [0], [1], [0, 0, 1, 1], [], []>} : vector<8x128xf32>, vector<128x128xf32>, vector<8x128xf32> -> vector<8x128xf32>
    %c0_31 = arith.constant 0 : index
    %c0_32 = arith.constant 0 : index
    %174 = vector.load %arg12[%c0_31, %c0_32] : memref<1x128xf32, #tpu.memory_space<vmem>>, vector<1x128xf32>
    %175 = vector.broadcast %174 : vector<1x128xf32> to vector<8x128xf32>
    %176 = arith.addf %173, %175 : vector<8x128xf32>
    %c0_33 = arith.constant 0 : index
    %c0_34 = arith.constant 0 : index
    %177 = vector.load %arg13[%c0_33, %c0_34] : memref<8x128xf32, #tpu.memory_space<vmem>>, vector<8x128xf32>
    tpu.vector_store %arg13[%c0_33, %c0_34], %176 {strides = array<i32>} : memref<8x128xf32, #tpu.memory_space<vmem>>, vector<8x128xf32>,
    return
  }
  func.func @transform_0(%arg0: i32) -> (i32, i32) {
    %c0_i32 = arith.constant 0 : i32
    %c0_i32_0 = arith.constant 0 : i32
    return %arg0, %c0_i32 : i32, i32
  }
  func.func @transform_1(%arg0: i32) -> (i32, i32) {
    %c0_i32 = arith.constant 0 : i32
    %c0_i32_0 = arith.constant 0 : i32
    return %arg0, %c0_i32 : i32, i32
  }
  func.func @transform_2(%arg0: i32) -> (i32, i32) {
    %c0_i32 = arith.constant 0 : i32
    %c0_i32_0 = arith.constant 0 : i32
    return %arg0, %c0_i32 : i32, i32
  }
  func.func @transform_3(%arg0: i32) -> (i32, i32) {
    %c0_i32 = arith.constant 0 : i32
    %c0_i32_0 = arith.constant 0 : i32
    %c0_i32_1 = arith.constant 0 : i32
    return %c0_i32, %c0_i32_0 : i32, i32
  }
  func.func @transform_4(%arg0: i32) -> (i32, i32) {
    %c0_i32 = arith.constant 0 : i32
    %c0_i32_0 = arith.constant 0 : i32
    %c0_i32_1 = arith.constant 0 : i32
    return %c0_i32, %c0_i32_0 : i32, i32
  }
  func.func @transform_5(%arg0: i32) -> (i32, i32) {
    %c0_i32 = arith.constant 0 : i32
    %c0_i32_0 = arith.constant 0 : i32
    %c0_i32_1 = arith.constant 0 : i32
    return %c0_i32, %c0_i32_0 : i32, i32
  }
  func.func @transform_6(%arg0: i32) -> (i32, i32) {
    %c0_i32 = arith.constant 0 : i32
    %c0_i32_0 = arith.constant 0 : i32
    %c0_i32_1 = arith.constant 0 : i32
    return %c0_i32, %c0_i32_0 : i32, i32
  }
  func.func @transform_7(%arg0: i32) -> (i32, i32) {
    %c0_i32 = arith.constant 0 : i32
    %c0_i32_0 = arith.constant 0 : i32
    %c0_i32_1 = arith.constant 0 : i32
    return %c0_i32, %c0_i32_0 : i32, i32
  }
  func.func @transform_8(%arg0: i32) -> (i32, i32) {
    %c0_i32 = arith.constant 0 : i32
    %c0_i32_0 = arith.constant 0 : i32
    %c0_i32_1 = arith.constant 0 : i32
    return %c0_i32, %c0_i32_0 : i32, i32
  }
  func.func @transform_9(%arg0: i32) -> (i32, i32) {
    %c0_i32 = arith.constant 0 : i32
    %c0_i32_0 = arith.constant 0 : i32
    %c0_i32_1 = arith.constant 0 : i32
    return %c0_i32, %c0_i32_0 : i32, i32
  }
  func.func @transform_10(%arg0: i32) -> (i32, i32) {
    %c0_i32 = arith.constant 0 : i32
    %c0_i32_0 = arith.constant 0 : i32
    %c0_i32_1 = arith.constant 0 : i32
    return %c0_i32, %c0_i32_0 : i32, i32
  }
  func.func @transform_11(%arg0: i32) -> (i32, i32) {
    %c0_i32 = arith.constant 0 : i32
    %c0_i32_0 = arith.constant 0 : i32
    %c0_i32_1 = arith.constant 0 : i32
    return %c0_i32, %c0_i32_0 : i32, i32
  }
  func.func @transform_12(%arg0: i32) -> (i32, i32) {
    %c0_i32 = arith.constant 0 : i32
    %c0_i32_0 = arith.constant 0 : i32
    return %arg0, %c0_i32 : i32, i32
  }
}

</mosaic_0001>

<llo_original>
// kernel: tpu_custom_call.1
$region0: #{tpu_custom_call.1}
  #allocation0 [shape = 'u32[]', space=smem, size = 0x4, offset = 0x4, fixed_abs, tag = 'smem constant byte address 0x4 - core index']
  #allocation1 [shape = 'u32[72,128]{1,0:T(1,128)}', space=vmem, size = 0x9000, scoped, tag = 'internal scratch']
  %s0 = inlined_call_operand.vmem [shape: s32[8,8], index: 0, kind: input, shape index: {}]
  %s1 = inlined_call_operand.vmem [shape: s32[8,8], index: 1, kind: input, shape index: {}]
  %s2 = inlined_call_operand.vmem [shape: s32[8,8], index: 2, kind: input, shape index: {}]
  %s3 = inlined_call_operand.vmem [shape: f32[56,32], index: 3, kind: input, shape index: {}]
  %s4 = inlined_call_operand.vmem [shape: f32[64,32], index: 4, kind: input, shape index: {}]
  %s5 = inlined_call_operand.vmem [shape: f32[64,32], index: 5, kind: input, shape index: {}]
  %s6 = inlined_call_operand.vmem [shape: f32[32,128], index: 6, kind: input, shape index: {}]
  %s7 = inlined_call_operand.vmem [shape: f32[32,128], index: 7, kind: input, shape index: {}]
  %s8 = inlined_call_operand.hbm [shape: f32[32,128], index: 8, kind: input, shape index: {}]
  %s9 = inlined_call_operand.vmem [shape: f32[1,128], index: 9, kind: input, shape index: {}]
  %s10 = inlined_call_operand.vmem [shape: f32[128,128], index: 10, kind: input, shape index: {}]
  %s11 = inlined_call_operand.vmem [shape: f32[1,128], index: 11, kind: input, shape index: {}]
  %s12 = inlined_call_operand.hbm [shape: f32[8,128], index: 12, kind: output, shape index: {}]
  %s13 = sld [smem:[#allocation0]]
  $region62: #{tpu_custom_call.1} parent=0
    _
  %s15 = ssub.s32 1, %s13
  %s16 = scalar_select 0, %s15, %s13
  $region1: #{tpu_custom_call.1} parent=0
    #allocation2 [shape = 'u8[16384]{0}', space=vmem, size = 0x4000, scoped, tag = 'input window, operand 8, single buffered']
    #allocation3 [shape = 's32[1]{0}', space=sflag, size = 0x4, scoped, tag = 'scoped memory for tpu_custom_call.1']
    #allocation4 [shape = 's32[1]{0}', space=sflag, size = 0x4, scoped, tag = 'scoped memory for tpu_custom_call.1']
    #allocation5 [shape = 'u8[4096]{0}', space=vmem, size = 0x1000, scoped, tag = 'output window, operand 0, single buffered']
    %17 = vsyncpa [#allocation3], 0
    %18 = vsyncpa [#allocation4], 0
    // Predicated region
    $region2: #{tpu_custom_call.1} parent=1 // pred_check
      _
    $region3: #{tpu_custom_call.1} parent=1 // pred_check_branch
      %20 = sbr.rel (0) target = $region5
    $region4: #{tpu_custom_call.1} parent=1 // pred_region
      _
    $region5: #{tpu_custom_call.1} parent=1 // pred_fallthru
      _
    // Predicated region
    $region6: #{tpu_custom_call.1} parent=1 // pred_check
      _
    $region7: #{tpu_custom_call.1} parent=1 // pred_check_branch
      %22 = sbr.rel (0) target = $region9
    $region8: #{tpu_custom_call.1} parent=1 // pred_region
      _
    $region9: #{tpu_custom_call.1} parent=1 // pred_fallthru
      _
    // Predicated region
    $region10: #{tpu_custom_call.1} parent=1 // pred_check
      _
    $region11: #{tpu_custom_call.1} parent=1 // pred_check_branch
      %24 = sbr.rel (0) target = $region13
    $region12: #{tpu_custom_call.1} parent=1 // pred_region
      _
    $region13: #{tpu_custom_call.1} parent=1 // pred_fallthru
      _
    // Predicated region
    $region14: #{tpu_custom_call.1} parent=1 // pred_check
      _
    $region15: #{tpu_custom_call.1} parent=1 // pred_check_branch
      %26 = sbr.rel (0) target = $region17
    $region16: #{tpu_custom_call.1} parent=1 // pred_region
      _
    $region17: #{tpu_custom_call.1} parent=1 // pred_fallthru
      _
    // Predicated region
    $region18: #{tpu_custom_call.1} parent=1 // pred_check
      _
    $region19: #{tpu_custom_call.1} parent=1 // pred_check_branch
      %28 = sbr.rel (0) target = $region21
    $region20: #{tpu_custom_call.1} parent=1 // pred_region
      _
    $region21: #{tpu_custom_call.1} parent=1 // pred_fallthru
      _
    // Predicated region
    $region22: #{tpu_custom_call.1} parent=1 // pred_check
      _
    $region23: #{tpu_custom_call.1} parent=1 // pred_check_branch
      %30 = sbr.rel (0) target = $region25
    $region24: #{tpu_custom_call.1} parent=1 // pred_region
      _
    $region25: #{tpu_custom_call.1} parent=1 // pred_fallthru
      _
    // Predicated region
    $region26: #{tpu_custom_call.1} parent=1 // pred_check
      _
    $region27: #{tpu_custom_call.1} parent=1 // pred_check_branch
      %32 = sbr.rel (0) target = $region29
    $region28: #{tpu_custom_call.1} parent=1 // pred_region
      _
    $region29: #{tpu_custom_call.1} parent=1 // pred_fallthru
      _
    // Predicated region
    $region30: #{tpu_custom_call.1} parent=1 // pred_check
      _
    $region31: #{tpu_custom_call.1} parent=1 // pred_check_branch
      %34 = sbr.rel (0) target = $region33
    $region32: #{tpu_custom_call.1} parent=1 // pred_region
      _
    $region33: #{tpu_custom_call.1} parent=1 // pred_fallthru
      _
    // Predicated region
    $region34: #{tpu_custom_call.1} parent=1 // pred_check
      _
    $region35: #{tpu_custom_call.1} parent=1 // pred_check_branch
      %36 = sbr.rel (0) target = $region37
    $region36: #{tpu_custom_call.1} parent=1 // pred_region
      %38 = vsyncadd [#allocation3], 0
      %s39 = sshll.u32 %s8, 4
      %s40 = int_to_ptr.hbm [resolvable:$true] %s39
      %s41 = sshll.u32 [#allocation2], 4
      %s42 = int_to_ptr.vmem [resolvable:$true] %s41
      %47 = dma.hbm_to_vmem [thread:$0]  %s40, 512, %s42, [#allocation3], 128, 128, 8
    $region37: #{tpu_custom_call.1} parent=1 // pred_fallthru
      _
    // Predicated region
    $region38: #{tpu_custom_call.1} parent=1 // pred_check
      _
    $region39: #{tpu_custom_call.1} parent=1 // pred_check_branch
      %49 = sbr.rel (0) target = $region41
    $region40: #{tpu_custom_call.1} parent=1 // pred_region
      _
    $region41: #{tpu_custom_call.1} parent=1 // pred_fallthru
      _
    // Predicated region
    $region42: #{tpu_custom_call.1} parent=1 // pred_check
      _
    $region43: #{tpu_custom_call.1} parent=1 // pred_check_branch
      %51 = sbr.rel (0) target = $region45
    $region44: #{tpu_custom_call.1} parent=1 // pred_region
      _
    $region45: #{tpu_custom_call.1} parent=1 // pred_fallthru
      _
    // Predicated region
    $region46: #{tpu_custom_call.1} parent=1 // pred_check
      _
    $region47: #{tpu_custom_call.1} parent=1 // pred_check_branch
      %53 = sbr.rel (0) target = $region49
    $region48: #{tpu_custom_call.1} parent=1 // pred_region
      _
    $region49: #{tpu_custom_call.1} parent=1 // pred_fallthru
      _
    // Predicated region
    $region50: #{tpu_custom_call.1} parent=1 // pred_check
      _
    $region51: #{tpu_custom_call.1} parent=1 // pred_check_branch
      %55 = sbr.rel (0) target = $region53
    $region52: #{tpu_custom_call.1} parent=1 // pred_region
      %57 = dma.done [#allocation3], 512
    $region53: #{tpu_custom_call.1} parent=1 // pred_fallthru
      _
    %v58 = vld [vmem:[%s0] sm:$0xff]
    %v59 = vlaneseq
    %v60 = vand.u32 %v59, 127
    %61 = vset.pattern.permute.xlu0 0
    %62 = vperm.xlu0 %61, %v58
    %v63 = vpop.permute.xlu0 %62
    %vm64 = vcmp.eq.s32.totalorder %v60, %v63
    %v65 = vsel %vm64, 1, 0
    %v66 = vcvt.s32.f32 %v65
    %v67 = vadd.f32 %v66, 0.0
    %68 = vset.pattern.permute.xlu0 1
    %69 = vperm.xlu0 %68, %v58
    %v70 = vpop.permute.xlu0 %69
    %vm71 = vcmp.eq.s32.totalorder %v60, %v70
    %v72 = vsel %vm71, 1, 0
    %v73 = vcvt.s32.f32 %v72
    %v74 = vadd.f32 %v67, %v73
    %75 = vset.pattern.permute.xlu0 2
    %76 = vperm.xlu0 %75, %v58
    %v77 = vpop.permute.xlu0 %76
    %vm78 = vcmp.eq.s32.totalorder %v60, %v77
    %v79 = vsel %vm78, 1, 0
    %v80 = vcvt.s32.f32 %v79
    %v81 = vadd.f32 %v74, %v80
    %82 = vset.pattern.permute.xlu0 3
    %83 = vperm.xlu0 %82, %v58
    %v84 = vpop.permute.xlu0 %83
    %vm85 = vcmp.eq.s32.totalorder %v60, %v84
    %v86 = vsel %vm85, 1, 0
    %v87 = vcvt.s32.f32 %v86
    %v88 = vadd.f32 %v81, %v87
    %89 = vset.pattern.permute.xlu0 4
    %90 = vperm.xlu0 %89, %v58
    %v91 = vpop.permute.xlu0 %90
    %vm92 = vcmp.eq.s32.totalorder %v60, %v91
    %v93 = vsel %vm92, 1, 0
    %v94 = vcvt.s32.f32 %v93
    %v95 = vadd.f32 %v88, %v94
    %96 = vset.pattern.permute.xlu0 5
    %97 = vperm.xlu0 %96, %v58
    %v98 = vpop.permute.xlu0 %97
    %vm99 = vcmp.eq.s32.totalorder %v60, %v98
    %v100 = vsel %vm99, 1, 0
    %v101 = vcvt.s32.f32 %v100
    %v102 = vadd.f32 %v95, %v101
    %103 = vset.pattern.permute.xlu0 6
    %104 = vperm.xlu0 %103, %v58
    %v105 = vpop.permute.xlu0 %104
    %vm106 = vcmp.eq.s32.totalorder %v60, %v105
    %v107 = vsel %vm106, 1, 0
    %v108 = vcvt.s32.f32 %v107
    %v109 = vadd.f32 %v102, %v108
    %110 = vset.pattern.permute.xlu0 7
    %111 = vperm.xlu0 %110, %v58
    %v112 = vpop.permute.xlu0 %111
    %vm113 = vcmp.eq.s32.totalorder %v60, %v112
    %v114 = vsel %vm113, 1, 0
    %v115 = vcvt.s32.f32 %v114
    %v116 = vadd.f32 %v109, %v115
    %v117 = vld [vmem:[%s3] sm:$0xff]
    %v118 = vld [vmem:[%s3 + $0x8] sm:$0xff]
    %v119 = vld [vmem:[%s3 + $0x10] sm:$0xff]
    %v120 = vld [vmem:[%s3 + $0x18] sm:$0xff]
    %v121 = vld [vmem:[%s3 + $0x20] sm:$0xff]
    %v122 = vld [vmem:[%s3 + $0x28] sm:$0xff]
    %v123 = vld [vmem:[%s3 + $0x30] sm:$0xff]
    %vm124 = vcmask 457728
    %v126 = vsel %vm124, %v116, 0
    %128 = vmatpush.msra.mxu0 0.0
    %129 = vmatpush.msra.mxu0 0.0
    %130 = vmatpush.msra.mxu0 0.0
    %131 = vmatpush.msra.mxu0 0.0
    %132 = vmatpush.msra.mxu0 0.0
    %133 = vmatpush.msra.mxu0 0.0
    %134 = vmatpush.msra.mxu0 0.0
    %135 = vmatpush.msra.mxu0 0.0
    %136 = vmatpush.msra.mxu0 0.0
    %137 = vmatpush.msra.mxu0 %v123
    %138 = vmatpush.msra.mxu0 %v122
    %139 = vmatpush.msra.mxu0 %v121
    %140 = vmatpush.msra.mxu0 %v120
    %141 = vmatpush.msra.mxu0 %v119
    %142 = vmatpush.msra.mxu0 %v118
    %143 = vmatpush.msra.mxu0 %v117
    %144 = vmatmul.f32.gmra.mxu0 %v126
    %v145 = vpop.f32.mrf.mxu0
    %v146 = vadd.f32 0.0, %v145
    %147 = vdwg.mxu0
    %v148 = vld [vmem:[%s1] sm:$0xff]
    %149 = vset.pattern.permute.xlu0 0
    %150 = vperm.xlu0 %149, %v148
    %v151 = vpop.permute.xlu0 %150
    %vm152 = vcmp.eq.s32.totalorder %v60, %v151
    %v153 = vsel %vm152, 1, 0
    %v154 = vcvt.s32.f32 %v153
    %v155 = vadd.f32 %v154, 0.0
    %156 = vset.pattern.permute.xlu0 1
    %157 = vperm.xlu0 %156, %v148
    %v158 = vpop.permute.xlu0 %157
    %vm159 = vcmp.eq.s32.totalorder %v60, %v158
    %v160 = vsel %vm159, 1, 0
    %v161 = vcvt.s32.f32 %v160
    %v162 = vadd.f32 %v155, %v161
    %163 = vset.pattern.permute.xlu0 2
    %164 = vperm.xlu0 %163, %v148
    %v165 = vpop.permute.xlu0 %164
    %vm166 = vcmp.eq.s32.totalorder %v60, %v165
    %v167 = vsel %vm166, 1, 0
    %v168 = vcvt.s32.f32 %v167
    %v169 = vadd.f32 %v162, %v168
    %170 = vset.pattern.permute.xlu0 3
    %171 = vperm.xlu0 %170, %v148
    %v172 = vpop.permute.xlu0 %171
    %vm173 = vcmp.eq.s32.totalorder %v60, %v172
    %v174 = vsel %vm173, 1, 0
    %v175 = vcvt.s32.f32 %v174
    %v176 = vadd.f32 %v169, %v175
    %177 = vset.pattern.permute.xlu0 4
    %178 = vperm.xlu0 %177, %v148
    %v179 = vpop.permute.xlu0 %178
    %vm180 = vcmp.eq.s32.totalorder %v60, %v179
    %v181 = vsel %vm180, 1, 0
    %v182 = vcvt.s32.f32 %v181
    %v183 = vadd.f32 %v176, %v182
    %184 = vset.pattern.permute.xlu0 5
    %185 = vperm.xlu0 %184, %v148
    %v186 = vpop.permute.xlu0 %185
    %vm187 = vcmp.eq.s32.totalorder %v60, %v186
    %v188 = vsel %vm187, 1, 0
    %v189 = vcvt.s32.f32 %v188
    %v190 = vadd.f32 %v183, %v189
    %191 = vset.pattern.permute.xlu0 6
    %192 = vperm.xlu0 %191, %v148
    %v193 = vpop.permute.xlu0 %192
    %vm194 = vcmp.eq.s32.totalorder %v60, %v193
    %v195 = vsel %vm194, 1, 0
    %v196 = vcvt.s32.f32 %v195
    %v197 = vadd.f32 %v190, %v196
    %198 = vset.pattern.permute.xlu0 7
    %199 = vperm.xlu0 %198, %v148
    %v200 = vpop.permute.xlu0 %199
    %vm201 = vcmp.eq.s32.totalorder %v60, %v200
    %v202 = vsel %vm201, 1, 0
    %v203 = vcvt.s32.f32 %v202
    %v204 = vadd.f32 %v197, %v203
    %v205 = vld [vmem:[%s4] sm:$0xff]
    %v206 = vld [vmem:[%s4 + $0x8] sm:$0xff]
    %v207 = vld [vmem:[%s4 + $0x10] sm:$0xff]
    %v208 = vld [vmem:[%s4 + $0x18] sm:$0xff]
    %v209 = vld [vmem:[%s4 + $0x20] sm:$0xff]
    %v210 = vld [vmem:[%s4 + $0x28] sm:$0xff]
    %v211 = vld [vmem:[%s4 + $0x30] sm:$0xff]
    %v212 = vld [vmem:[%s4 + $0x38] sm:$0xff]
    %vm213 = vcmask 523264
    %v215 = vsel %vm213, %v204, 0
    %217 = vmatpush.msra.mxu0 0.0
    %218 = vmatpush.msra.mxu0 0.0
    %219 = vmatpush.msra.mxu0 0.0
    %220 = vmatpush.msra.mxu0 0.0
    %221 = vmatpush.msra.mxu0 0.0
    %222 = vmatpush.msra.mxu0 0.0
    %223 = vmatpush.msra.mxu0 0.0
    %224 = vmatpush.msra.mxu0 0.0
    %225 = vmatpush.msra.mxu0 %v212
    %226 = vmatpush.msra.mxu0 %v211
    %227 = vmatpush.msra.mxu0 %v210
    %228 = vmatpush.msra.mxu0 %v209
    %229 = vmatpush.msra.mxu0 %v208
    %230 = vmatpush.msra.mxu0 %v207
    %231 = vmatpush.msra.mxu0 %v206
    %232 = vmatpush.msra.mxu0 %v205
    %233 = vmatmul.f32.gmra.mxu0 %v215
    %v234 = vpop.f32.mrf.mxu0
    %v235 = vadd.f32 0.0, %v234
    %236 = vdwg.mxu0
    %v237 = vld [vmem:[%s2] sm:$0xff]
    %238 = vset.pattern.permute.xlu0 0
    %239 = vperm.xlu0 %238, %v237
    %v240 = vpop.permute.xlu0 %239
    %vm241 = vcmp.eq.s32.totalorder %v60, %v240
    %v242 = vsel %vm241, 1, 0
    %v243 = vcvt.s32.f32 %v242
    %v244 = vadd.f32 %v243, 0.0
    %245 = vset.pattern.permute.xlu0 1
    %246 = vperm.xlu0 %245, %v237
    %v247 = vpop.permute.xlu0 %246
    %vm248 = vcmp.eq.s32.totalorder %v60, %v247
    %v249 = vsel %vm248, 1, 0
    %v250 = vcvt.s32.f32 %v249
    %v251 = vadd.f32 %v244, %v250
    %252 = vset.pattern.permute.xlu0 2
    %253 = vperm.xlu0 %252, %v237
    %v254 = vpop.permute.xlu0 %253
    %vm255 = vcmp.eq.s32.totalorder %v60, %v254
    %v256 = vsel %vm255, 1, 0
    %v257 = vcvt.s32.f32 %v256
    %v258 = vadd.f32 %v251, %v257
    %259 = vset.pattern.permute.xlu0 3
    %260 = vperm.xlu0 %259, %v237
    %v261 = vpop.permute.xlu0 %260
    %vm262 = vcmp.eq.s32.totalorder %v60, %v261
    %v263 = vsel %vm262, 1, 0
    %v264 = vcvt.s32.f32 %v263
    %v265 = vadd.f32 %v258, %v264
    %266 = vset.pattern.permute.xlu0 4
    %267 = vperm.xlu0 %266, %v237
    %v268 = vpop.permute.xlu0 %267
    %vm269 = vcmp.eq.s32.totalorder %v60, %v268
    %v270 = vsel %vm269, 1, 0
    %v271 = vcvt.s32.f32 %v270
    %v272 = vadd.f32 %v265, %v271
    %273 = vset.pattern.permute.xlu0 5
    %274 = vperm.xlu0 %273, %v237
    %v275 = vpop.permute.xlu0 %274
    %vm276 = vcmp.eq.s32.totalorder %v60, %v275
    %v277 = vsel %vm276, 1, 0
    %v278 = vcvt.s32.f32 %v277
    %v279 = vadd.f32 %v272, %v278
    %280 = vset.pattern.permute.xlu0 6
    %281 = vperm.xlu0 %280, %v237
    %v282 = vpop.permute.xlu0 %281
    %vm283 = vcmp.eq.s32.totalorder %v60, %v282
    %v284 = vsel %vm283, 1, 0
    %v285 = vcvt.s32.f32 %v284
    %v286 = vadd.f32 %v279, %v285
    %287 = vset.pattern.permute.xlu0 7
    %288 = vperm.xlu0 %287, %v237
    %v289 = vpop.permute.xlu0 %288
    %vm290 = vcmp.eq.s32.totalorder %v60, %v289
    %v291 = vsel %vm290, 1, 0
    %v292 = vcvt.s32.f32 %v291
    %v293 = vadd.f32 %v286, %v292
    %v294 = vld [vmem:[%s5] sm:$0xff]
    %v295 = vld [vmem:[%s5 + $0x8] sm:$0xff]
    %v296 = vld [vmem:[%s5 + $0x10] sm:$0xff]
    %v297 = vld [vmem:[%s5 + $0x18] sm:$0xff]
    %v298 = vld [vmem:[%s5 + $0x20] sm:$0xff]
    %v299 = vld [vmem:[%s5 + $0x28] sm:$0xff]
    %v300 = vld [vmem:[%s5 + $0x30] sm:$0xff]
    %v301 = vld [vmem:[%s5 + $0x38] sm:$0xff]
    %v303 = vsel %vm213, %v293, 0
    %305 = vmatpush.msra.mxu0 0.0
    %306 = vmatpush.msra.mxu0 0.0
    %307 = vmatpush.msra.mxu0 0.0
    %308 = vmatpush.msra.mxu0 0.0
    %309 = vmatpush.msra.mxu0 0.0
    %310 = vmatpush.msra.mxu0 0.0
    %311 = vmatpush.msra.mxu0 0.0
    %312 = vmatpush.msra.mxu0 0.0
    %313 = vmatpush.msra.mxu0 %v301
    %314 = vmatpush.msra.mxu0 %v300
    %315 = vmatpush.msra.mxu0 %v299
    %316 = vmatpush.msra.mxu0 %v298
    %317 = vmatpush.msra.mxu0 %v297
    %318 = vmatpush.msra.mxu0 %v296
    %319 = vmatpush.msra.mxu0 %v295
    %320 = vmatpush.msra.mxu0 %v294
    %321 = vmatmul.f32.gmra.mxu0 %v303
    %v322 = vpop.f32.mrf.mxu0
    %v323 = vadd.f32 0.0, %v322
    %324 = vdwg.mxu0
    %v325 = vld [vmem:[%s6] sm:$0xff]
    %v326 = vld [vmem:[%s6 + $0x8] sm:$0xff]
    %v327 = vld [vmem:[%s6 + $0x10] sm:$0xff]
    %v328 = vld [vmem:[%s6 + $0x18] sm:$0xff]
    %v329 = vld [vmem:[%s7] sm:$0xff]
    %v330 = vld [vmem:[%s7 + $0x8] sm:$0xff]
    %v331 = vld [vmem:[%s7 + $0x10] sm:$0xff]
    %v332 = vld [vmem:[%s7 + $0x18] sm:$0xff]
    %vm333 = vcmask 261120
    %v335 = vsel %vm333, %v235, 0
    %337 = vmatpush.msra.mxu0 0.0
    %338 = vmatpush.msra.mxu0 0.0
    %339 = vmatpush.msra.mxu0 0.0
    %340 = vmatpush.msra.mxu0 0.0
    %341 = vmatpush.msra.mxu0 0.0
    %342 = vmatpush.msra.mxu0 0.0
    %343 = vmatpush.msra.mxu0 0.0
    %344 = vmatpush.msra.mxu0 0.0
    %345 = vmatpush.msra.mxu0 0.0
    %346 = vmatpush.msra.mxu0 0.0
    %347 = vmatpush.msra.mxu0 0.0
    %348 = vmatpush.msra.mxu0 0.0
    %349 = vmatpush.msra.mxu0 %v332
    %350 = vmatpush.msra.mxu0 %v331
    %351 = vmatpush.msra.mxu0 %v330
    %352 = vmatpush.msra.mxu0 %v329
    %353 = vmatmul.f32.gmra.mxu0 %v335
    %v354 = vpop.f32.mrf.mxu0
    %v355 = vadd.f32 0.0, %v354
    %356 = vdwg.mxu0
    %v358 = vsel %vm333, %v146, 0
    %360 = vmatpush.msra.mxu0 0.0
    %361 = vmatpush.msra.mxu0 0.0
    %362 = vmatpush.msra.mxu0 0.0
    %363 = vmatpush.msra.mxu0 0.0
    %364 = vmatpush.msra.mxu0 0.0
    %365 = vmatpush.msra.mxu0 0.0
    %366 = vmatpush.msra.mxu0 0.0
    %367 = vmatpush.msra.mxu0 0.0
    %368 = vmatpush.msra.mxu0 0.0
    %369 = vmatpush.msra.mxu0 0.0
    %370 = vmatpush.msra.mxu0 0.0
    %371 = vmatpush.msra.mxu0 0.0
    %372 = vmatpush.msra.mxu0 %v328
    %373 = vmatpush.msra.mxu0 %v327
    %374 = vmatpush.msra.mxu0 %v326
    %375 = vmatpush.msra.mxu0 %v325
    %376 = vmatmul.f32.gmra.mxu0 %v358
    %v377 = vpop.f32.mrf.mxu0
    %v378 = vadd.f32 %v355, %v377
    %379 = vdwg.mxu0
    %v380 = vld [vmem:[#allocation2] sm:$0xff]
    %v381 = vld [vmem:[#allocation2 + $0x8] sm:$0xff]
    %v382 = vld [vmem:[#allocation2 + $0x10] sm:$0xff]
    %v383 = vld [vmem:[#allocation2 + $0x18] sm:$0xff]
    %v385 = vsel %vm333, %v323, 0
    %387 = vmatpush.msra.mxu0 0.0
    %388 = vmatpush.msra.mxu0 0.0
    %389 = vmatpush.msra.mxu0 0.0
    %390 = vmatpush.msra.mxu0 0.0
    %391 = vmatpush.msra.mxu0 0.0
    %392 = vmatpush.msra.mxu0 0.0
    %393 = vmatpush.msra.mxu0 0.0
    %394 = vmatpush.msra.mxu0 0.0
    %395 = vmatpush.msra.mxu0 0.0
    %396 = vmatpush.msra.mxu0 0.0
    %397 = vmatpush.msra.mxu0 0.0
    %398 = vmatpush.msra.mxu0 0.0
    %399 = vmatpush.msra.mxu0 %v383
    %400 = vmatpush.msra.mxu0 %v382
    %401 = vmatpush.msra.mxu0 %v381
    %402 = vmatpush.msra.mxu0 %v380
    %403 = vmatmul.f32.gmra.mxu0 %v385
    %v404 = vpop.f32.mrf.mxu0
    %v405 = vadd.f32 0.0, %v404
    %406 = vdwg.mxu0
    %v407 = vadd.f32 %v378, %v405
    %v408 = vld [vmem:[%s9] sm:$0x1]
    %v410 = vperm.slane %v408, 0
    %v412 = vadd.f32 %v407, %v410
    %v413 = vmax.f32 %v412, 0.0
    %v414 = vld [vmem:[%s10] sm:$0xff]
    %v415 = vld [vmem:[%s10 + $0x8] sm:$0xff]
    %v416 = vld [vmem:[%s10 + $0x10] sm:$0xff]
    %v417 = vld [vmem:[%s10 + $0x18] sm:$0xff]
    %v418 = vld [vmem:[%s10 + $0x20] sm:$0xff]
    %v419 = vld [vmem:[%s10 + $0x28] sm:$0xff]
    %v420 = vld [vmem:[%s10 + $0x30] sm:$0xff]
    %v421 = vld [vmem:[%s10 + $0x38] sm:$0xff]
    %v422 = vld [vmem:[%s10 + $0x40] sm:$0xff]
    %v423 = vld [vmem:[%s10 + $0x48] sm:$0xff]
    %v424 = vld [vmem:[%s10 + $0x50] sm:$0xff]
    %v425 = vld [vmem:[%s10 + $0x58] sm:$0xff]
    %v426 = vld [vmem:[%s10 + $0x60] sm:$0xff]
    %v427 = vld [vmem:[%s10 + $0x68] sm:$0xff]
    %v428 = vld [vmem:[%s10 + $0x70] sm:$0xff]
    %v429 = vld [vmem:[%s10 + $0x78] sm:$0xff]
    %v430 = vld [vmem:[%s11] sm:$0x1]
    %v432 = vperm.slane %v430, 0
    %434 = vmatpush.msra.mxu0 %v429
    %435 = vmatpush.msra.mxu0 %v428
    %436 = vmatpush.msra.mxu0 %v427
    %437 = vmatpush.msra.mxu0 %v426
    %438 = vmatpush.msra.mxu0 %v425
    %439 = vmatpush.msra.mxu0 %v424
    %440 = vmatpush.msra.mxu0 %v423
    %441 = vmatpush.msra.mxu0 %v422
    %442 = vmatpush.msra.mxu0 %v421
    %443 = vmatpush.msra.mxu0 %v420
    %444 = vmatpush.msra.mxu0 %v419
    %445 = vmatpush.msra.mxu0 %v418
    %446 = vmatpush.msra.mxu0 %v417
    %447 = vmatpush.msra.mxu0 %v416
    %448 = vmatpush.msra.mxu0 %v415
    %449 = vmatpush.msra.mxu0 %v414
    %450 = vmatmul.f32.gmra.mxu0 %v413
    %v451 = vpop.f32.mrf.mxu0
    %v452 = vadd.f32 %v432, %v451
    %453 = vdwg.mxu0
    %454 = vst [vmem:[#allocation5] sm:$0xff] %v452
    // Predicated region
    $region54: #{tpu_custom_call.1} parent=1 // pred_check
      _
    $region55: #{tpu_custom_call.1} parent=1 // pred_check_branch
      %456 = sbr.rel (0) target = $region57
    $region56: #{tpu_custom_call.1} parent=1 // pred_region
      %458 = vsyncadd [#allocation4], 0
      %s460 = sshll.u32 [#allocation5], 4
      %s461 = int_to_ptr.vmem [resolvable:$true] %s460
      %s462 = sshll.u32 %s12, 4
      %s463 = int_to_ptr.hbm [resolvable:$true] %s462
      %465 = dma.vmem_to_hbm [thread:$0]  %s461, 128, %s463, [#allocation4]
    $region57: #{tpu_custom_call.1} parent=1 // pred_fallthru
      _
    // Predicated region
    $region58: #{tpu_custom_call.1} parent=1 // pred_check
      _
    $region59: #{tpu_custom_call.1} parent=1 // pred_check_branch
      %467 = sbr.rel (0) target = $region61
    $region60: #{tpu_custom_call.1} parent=1 // pred_region
      %469 = dma.done [#allocation4], 128
    $region61: #{tpu_custom_call.1} parent=1 // pred_fallthru
      _
    %470 = vsyncpa [#allocation3], 1
    %471 = vsyncpa [#allocation4], 1

</llo_original>
